<compile_context>
chip_gen: v6e
topology: v6e:2x2x1
jax: 0.10.0
libtpu: 0.0.40
codegen_flags: <defaults>
</compile_context>

<pallas_src>
import functools

import jax
import jax.numpy as jnp
from jax.experimental import pallas as pl
from jax.experimental.pallas import tpu as pltpu


# ----------------------------- tiling helper --------------------------------


def _pick_tile(n, target):
    """Full dim if it fits, else `target` when it divides n cleanly."""
    if n <= target:
        return n
    if n % target == 0:
        return target
    # TODO(synk): ragged N would need masked edge tiles; fall back to one tile.
    return n


# ------------------- kernel 1: fused dual projection -------------------------
# x is kept as (P, N, C) (P = previous layer's head count, 1 for the input
# layer) so the flatten(1) of the previous layer is folded into the contraction:
#   res[n, :] = sum_p x[p, n, :] @ w_cat[p, :, :]        -> (t_n, 2*H*D)
# The result is split per head into fs / fd of shape (H, N, D) so the attention
# kernel selects a head purely via its BlockSpec (no transposes anywhere).


def _proj_kernel(x_ref, w_ref, b_ref, fs_ref, fd_ref, *, n_heads, d_head):
    P = x_ref.shape[0]
    t_n = x_ref.shape[1]
    acc = jnp.zeros((t_n, w_ref.shape[2]), jnp.float32)
    for p in range(P):  # P is small (1 or `heads`); unrolled at trace time
        acc = acc + jnp.dot(x_ref[p], w_ref[p], preferred_element_type=jnp.float32)
    res = acc + b_ref[...]
    HD = n_heads * d_head
    for h in range(n_heads):
        fs_ref[h] = res[:, h * d_head:(h + 1) * d_head]
        fd_ref[h] = res[:, HD + h * d_head:HD + (h + 1) * d_head]


def dual_projection(x_hnd, w_cat, b_cat, n_heads, d_head, *, t_n_target=256):
    P, N, C = x_hnd.shape
    t_n = _pick_tile(N, t_n_target)
    kernel = functools.partial(_proj_kernel, n_heads=n_heads, d_head=d_head)
    fs, fd = pl.pallas_call(
        kernel,
        out_shape=(
            jax.ShapeDtypeStruct((n_heads, N, d_head), jnp.float32),
            jax.ShapeDtypeStruct((n_heads, N, d_head), jnp.float32),
        ),
        grid=(N // t_n,),
        in_specs=[
            pl.BlockSpec((P, t_n, C), lambda i: (0, i, 0)),
            pl.BlockSpec((P, C, 2 * n_heads * d_head), lambda i: (0, 0, 0)),
            pl.BlockSpec((1, 2 * n_heads * d_head), lambda i: (0, 0)),
        ],
        out_specs=(
            pl.BlockSpec((n_heads, t_n, d_head), lambda i: (0, i, 0)),
            pl.BlockSpec((n_heads, t_n, d_head), lambda i: (0, i, 0)),
        ),
        compiler_params=pltpu.CompilerParams(dimension_semantics=("parallel",)),
    )(x_hnd, w_cat, b_cat)
    return fs, fd


# -------------- kernel 2: GATv2 attention, flash-style tiled -----------------


def _attn_kernel(fs_ref, fd_ref, attn_ref, adj_ref, o_ref, m_sc, l_sc, acc_sc,
                 *, negative_slope, apply_relu):
    j = pl.program_id(2)

    @pl.when(j == 0)
    def _():
        m_sc[...] = jnp.full_like(m_sc, -1e30)
        l_sc[...] = jnp.zeros_like(l_sc)
        acc_sc[...] = jnp.zeros_like(acc_sc)

    fs = fs_ref[0]                       # (t_src, D) src features, this head
    fd = fd_ref[0]                       # (t_dst, D) dst features, this head
    a = attn_ref[0]                      # (1, D) attention vector, this head
    mask = adj_ref[...] != 0             # (t_dst, t_src) bool, adj is int8

    # GATv2 edge score (f32 element-wise math — safe on v5e too):
    #   e[v, u] = a . leaky_relu(fs[u] + fd[v])
    s = fs[None, :, :] + fd[:, None, :]                  # (t_dst, t_src, D)
    s = jnp.where(s >= 0, s, negative_slope * s)
    e = jnp.sum(s * a[None, :, :], axis=-1)              # (t_dst, t_src)
    e = jnp.where(mask, e, jnp.float32(-1e30))

    # Online softmax over the src tiles (edge softmax per destination node).
    m_prev = m_sc[...]
    m_new = jnp.maximum(m_prev, jnp.max(e, axis=-1, keepdims=True))
    corr = jnp.exp(m_prev - m_new)                       # (t_dst, 1)
    p = jnp.exp(e - m_new)
    p = jnp.where(mask, p, 0.0)                          # zero on non-edges
    l_sc[...] = corr * l_sc[...] + jnp.sum(p, axis=-1, keepdims=True)
    # Aggregation on the MXU with bf16 inputs, f32 accumulation.
    acc_sc[...] = corr * acc_sc[...] + jnp.dot(
        p.astype(jnp.bfloat16), fs.astype(jnp.bfloat16),
        preferred_element_type=jnp.float32)
    m_sc[...] = m_new

    @pl.when(j == pl.num_programs(2) - 1)
    def _():
        denom = l_sc[...]
        inv = pl.reciprocal(jnp.where(denom > 0, denom, 1.0), approx=True)
        out = acc_sc[...] * inv                          # zero-in-degree -> 0
        if apply_relu:                                   # fused layer epilogue
            out = jnp.maximum(out, 0.0)
        o_ref[0] = out.astype(o_ref.dtype)


def gatv2_attention(fs, fd, attn, adj_i8, *, negative_slope, apply_relu,
                    t_dst_target=256, t_src_target=256):
    H, N, D = fs.shape
    t_dst = _pick_tile(N, t_dst_target)
    t_src = _pick_tile(N, t_src_target)
    kernel = functools.partial(_attn_kernel, negative_slope=negative_slope,
                               apply_relu=apply_relu)
    return pl.pallas_call(
        kernel,
        out_shape=jax.ShapeDtypeStruct((H, N, D), jnp.float32),
        grid=(H, N // t_dst, N // t_src),
        in_specs=[
            pl.BlockSpec((1, t_src, D), lambda h, i, j: (h, j, 0)),
            pl.BlockSpec((1, t_dst, D), lambda h, i, j: (h, i, 0)),
            pl.BlockSpec((1, 1, D), lambda h, i, j: (h, 0, 0)),
            pl.BlockSpec((t_dst, t_src), lambda h, i, j: (i, j)),
        ],
        out_specs=pl.BlockSpec((1, t_dst, D), lambda h, i, j: (h, i, 0)),
        scratch_shapes=[
            pltpu.VMEM((t_dst, 1), jnp.float32),   # running max m
            pltpu.VMEM((t_dst, 1), jnp.float32),   # running denom l
            pltpu.VMEM((t_dst, D), jnp.float32),   # running weighted sum
        ],
        compiler_params=pltpu.CompilerParams(
            dimension_semantics=("parallel", "parallel", "arbitrary")),
    )(fs, fd, attn, adj_i8)


# ------------------------------ model glue -----------------------------------


def gatv2_layer(x_hnd, adj_i8, p, *, negative_slope=0.2, apply_relu=False):
    H, D = p["heads"], p["d_head"]
    fs, fd = dual_projection(x_hnd, p["w_cat"], p["b_cat"], H, D)
    return gatv2_attention(fs, fd, p["attn"], adj_i8,
                           negative_slope=negative_slope, apply_relu=apply_relu)


def init_gat_params(key, in_feats, h_feats, out_feats, n_layers, heads, out_heads):
    """Deterministic synthetic init; weights pre-packed for the fused kernels."""
    layer_dims = [(in_feats, 1, h_feats, heads)]                 # (Fin, P, D, H)
    for _ in range(n_layers - 1):
        layer_dims.append((h_feats * heads, heads, h_feats, heads))
    layer_dims.append((h_feats * heads, heads, out_feats, out_heads))

    params = []
    for fin, p_in, d, H in layer_dims:
        key, k1, k2, k3 = jax.random.split(key, 4)
        scale = 1.0 / jnp.sqrt(jnp.float32(fin))
        w_src = jax.random.normal(k1, (fin, H * d), jnp.float32) * scale
        w_dst = jax.random.normal(k2, (fin, H * d), jnp.float32) * scale
        attn = jax.random.normal(k3, (H, d), jnp.float32) / jnp.sqrt(jnp.float32(d))
        c = fin // p_in
        # [W_src | W_dst] concatenated on the output axis, rows split by the
        # previous layer's (head, feature) flatten order.
        w_cat = jnp.concatenate([w_src, w_dst], axis=1).reshape(p_in, c, 2 * H * d)
        b_cat = jnp.zeros((1, 2 * H * d), jnp.float32)
        params.append(dict(w_cat=w_cat, b_cat=b_cat, attn=attn.reshape(H, 1, d),
                           heads=H, d_head=d))
    return params


def gat_forward(params, adj_i8, features):
    # features (N, Fin) -> stacked-head layout (1, N, Fin)
    h = features[None, :, :]
    n_total = len(params)
    for i, p in enumerate(params):
        last = i == n_total - 1
        # hidden layers: flatten(1) is absorbed into the next projection's
        # contraction, ReLU is fused in-kernel, dropout(p=0.0) is identity.
        h = gatv2_layer(h, adj_i8, p, apply_relu=not last)
    return jnp.mean(h, axis=0)          # final layer: mean over heads


# --------------------------------- main ---------------------------------------

if __name__ == "__main__":
    N = 16           # nodes
    in_feats = 8
    h_feats = 8
    out_feats = 4
    n_layers = 2
    heads = 3
    out_heads = 1

    key = jax.random.PRNGKey(0)
    key, k_adj, k_x, k_p = jax.random.split(key, 4)

    # Random sparse directed graph with self-loops; dense int8 mask (dst, src).
    adj = jax.random.uniform(k_adj, (N, N)) < 0.3
    adj_i8 = jnp.logical_or(adj, jnp.eye(N, dtype=bool)).astype(jnp.int8)

    features = jax.random.normal(k_x, (N, in_feats), jnp.float32)
    params = init_gat_params(k_p, in_feats, h_feats, out_feats,
                             n_layers, heads, out_heads)

    out = gat_forward(params, adj_i8, features)
    out = jax.block_until_ready(out)

    assert out.shape == (N, out_feats), out.shape
    assert bool(jnp.all(jnp.isfinite(out)))
    print("KERNEL_OK")
</pallas_src>

<mosaic_0001>
module attributes {stable_mosaic.version = 11 : i64} {
  func.func @_proj_kernel(%arg0: i32, %arg1: memref<1x16x8xf32, #tpu.memory_space<vmem>>, %arg2: memref<1x8x48xf32, #tpu.memory_space<vmem>>, %arg3: memref<1x48xf32, #tpu.memory_space<vmem>>, %arg4: memref<3x16x8xf32, #tpu.memory_space<vmem>>, %arg5: memref<3x16x8xf32, #tpu.memory_space<vmem>>) attributes {dimension_semantics = [#tpu.dimension_semantics<parallel>], iteration_bounds = array<i64: 1>, scalar_prefetch = 0 : i64, scratch_operands = 0 : i64, tpu.core_type = #tpu.core_type<tc>, window_params = [{transform_indices = @transform_0, window_bounds = array<i64: 1, 16, 8>}, {pipeline_mode = #tpu.pipeline_mode<synchronous>, transform_indices = @transform_1, window_bounds = array<i64: 1, 8, 48>}, {pipeline_mode = #tpu.pipeline_mode<synchronous>, transform_indices = @transform_2, window_bounds = array<i64: 1, 48>}, {transform_indices = @transform_3, window_bounds = array<i64: 3, 16, 8>}, {transform_indices = @transform_4, window_bounds = array<i64: 3, 16, 8>}]} {
    %cst = arith.constant 0.000000e+00 : f32
    %0 = vector.broadcast %cst : f32 to vector<16x48xf32>
    %c0 = arith.constant 0 : index
    %c0_0 = arith.constant 0 : index
    %c0_1 = arith.constant 0 : index
    %1 = vector.load %arg1[%c0, %c0_0, %c0_1] : memref<1x16x8xf32, #tpu.memory_space<vmem>>, vector<1x16x8xf32>
    %2 = vector.shape_cast %1 : vector<1x16x8xf32> to vector<16x8xf32>
    %c0_2 = arith.constant 0 : index
    %c0_3 = arith.constant 0 : index
    %c0_4 = arith.constant 0 : index
    %3 = vector.load %arg2[%c0_2, %c0_3, %c0_4] : memref<1x8x48xf32, #tpu.memory_space<vmem>>, vector<1x8x48xf32>
    %4 = vector.shape_cast %3 : vector<1x8x48xf32> to vector<8x48xf32>
    %cst_5 = arith.constant dense<0.000000e+00> : vector<16x48xf32>
    %5 = tpu.matmul %2, %4, %cst_5 {dimension_numbers = #tpu.dot_dimension_numbers<[1], [0], [0], [1], [0, 0, 1, 1], [], []>} : vector<16x8xf32>, vector<8x48xf32>, vector<16x48xf32> -> vector<16x48xf32>
    %6 = arith.addf %0, %5 : vector<16x48xf32>
    %c0_6 = arith.constant 0 : index
    %c0_7 = arith.constant 0 : index
    %7 = vector.load %arg3[%c0_6, %c0_7] : memref<1x48xf32, #tpu.memory_space<vmem>>, vector<1x48xf32>
    %8 = vector.broadcast %7 : vector<1x48xf32> to vector<16x48xf32>
    %9 = arith.addf %6, %8 : vector<16x48xf32>
    %10 = vector.extract_strided_slice %9 {offsets = [0, 0], sizes = [16, 8], strides = [1, 1]} : vector<16x48xf32> to vector<16x8xf32>
    %c0_8 = arith.constant 0 : index
    %c0_9 = arith.constant 0 : index
    %c0_10 = arith.constant 0 : index
    %11 = vector.load %arg4[%c0_8, %c0_9, %c0_10] : memref<3x16x8xf32, #tpu.memory_space<vmem>>, vector<1x16x8xf32>
    %12 = vector.shape_cast %11 : vector<1x16x8xf32> to vector<16x8xf32>
    %13 = vector.shape_cast %10 : vector<16x8xf32> to vector<1x16x8xf32>
    tpu.vector_store %arg4[%c0_8, %c0_9, %c0_10], %13 {strides = array<i32>} : memref<3x16x8xf32, #tpu.memory_space<vmem>>, vector<1x16x8xf32>,
    %14 = vector.extract_strided_slice %9 {offsets = [0, 24], sizes = [16, 8], strides = [1, 1]} : vector<16x48xf32> to vector<16x8xf32>
    %c0_11 = arith.constant 0 : index
    %c0_12 = arith.constant 0 : index
    %c0_13 = arith.constant 0 : index
    %15 = vector.load %arg5[%c0_11, %c0_12, %c0_13] : memref<3x16x8xf32, #tpu.memory_space<vmem>>, vector<1x16x8xf32>
    %16 = vector.shape_cast %15 : vector<1x16x8xf32> to vector<16x8xf32>
    %17 = vector.shape_cast %14 : vector<16x8xf32> to vector<1x16x8xf32>
    tpu.vector_store %arg5[%c0_11, %c0_12, %c0_13], %17 {strides = array<i32>} : memref<3x16x8xf32, #tpu.memory_space<vmem>>, vector<1x16x8xf32>,
    %18 = vector.extract_strided_slice %9 {offsets = [0, 8], sizes = [16, 8], strides = [1, 1]} : vector<16x48xf32> to vector<16x8xf32>
    %c1 = arith.constant 1 : index
    %c0_14 = arith.constant 0 : index
    %c0_15 = arith.constant 0 : index
    %19 = vector.load %arg4[%c1, %c0_14, %c0_15] : memref<3x16x8xf32, #tpu.memory_space<vmem>>, vector<1x16x8xf32>
    %20 = vector.shape_cast %19 : vector<1x16x8xf32> to vector<16x8xf32>
    %21 = vector.shape_cast %18 : vector<16x8xf32> to vector<1x16x8xf32>
    tpu.vector_store %arg4[%c1, %c0_14, %c0_15], %21 {strides = array<i32>} : memref<3x16x8xf32, #tpu.memory_space<vmem>>, vector<1x16x8xf32>,
    %22 = vector.extract_strided_slice %9 {offsets = [0, 32], sizes = [16, 8], strides = [1, 1]} : vector<16x48xf32> to vector<16x8xf32>
    %c1_16 = arith.constant 1 : index
    %c0_17 = arith.constant 0 : index
    %c0_18 = arith.constant 0 : index
    %23 = vector.load %arg5[%c1_16, %c0_17, %c0_18] : memref<3x16x8xf32, #tpu.memory_space<vmem>>, vector<1x16x8xf32>
    %24 = vector.shape_cast %23 : vector<1x16x8xf32> to vector<16x8xf32>
    %25 = vector.shape_cast %22 : vector<16x8xf32> to vector<1x16x8xf32>
    tpu.vector_store %arg5[%c1_16, %c0_17, %c0_18], %25 {strides = array<i32>} : memref<3x16x8xf32, #tpu.memory_space<vmem>>, vector<1x16x8xf32>,
    %26 = vector.extract_strided_slice %9 {offsets = [0, 16], sizes = [16, 8], strides = [1, 1]} : vector<16x48xf32> to vector<16x8xf32>
    %c2 = arith.constant 2 : index
    %c0_19 = arith.constant 0 : index
    %c0_20 = arith.constant 0 : index
    %27 = vector.load %arg4[%c2, %c0_19, %c0_20] : memref<3x16x8xf32, #tpu.memory_space<vmem>>, vector<1x16x8xf32>
    %28 = vector.shape_cast %27 : vector<1x16x8xf32> to vector<16x8xf32>
    %29 = vector.shape_cast %26 : vector<16x8xf32> to vector<1x16x8xf32>
    tpu.vector_store %arg4[%c2, %c0_19, %c0_20], %29 {strides = array<i32>} : memref<3x16x8xf32, #tpu.memory_space<vmem>>, vector<1x16x8xf32>,
    %30 = vector.extract_strided_slice %9 {offsets = [0, 40], sizes = [16, 8], strides = [1, 1]} : vector<16x48xf32> to vector<16x8xf32>
    %c2_21 = arith.constant 2 : index
    %c0_22 = arith.constant 0 : index
    %c0_23 = arith.constant 0 : index
    %31 = vector.load %arg5[%c2_21, %c0_22, %c0_23] : memref<3x16x8xf32, #tpu.memory_space<vmem>>, vector<1x16x8xf32>
    %32 = vector.shape_cast %31 : vector<1x16x8xf32> to vector<16x8xf32>
    %33 = vector.shape_cast %30 : vector<16x8xf32> to vector<1x16x8xf32>
    tpu.vector_store %arg5[%c2_21, %c0_22, %c0_23], %33 {strides = array<i32>} : memref<3x16x8xf32, #tpu.memory_space<vmem>>, vector<1x16x8xf32>,
    return
  }
  func.func @transform_0(%arg0: i32) -> (i32, i32, i32) {
    %c0_i32 = arith.constant 0 : i32
    %c0_i32_0 = arith.constant 0 : i32
    %c0_i32_1 = arith.constant 0 : i32
    return %c0_i32, %arg0, %c0_i32_0 : i32, i32, i32
  }
  func.func @transform_1(%arg0: i32) -> (i32, i32, i32) {
    %c0_i32 = arith.constant 0 : i32
    %c0_i32_0 = arith.constant 0 : i32
    %c0_i32_1 = arith.constant 0 : i32
    %c0_i32_2 = arith.constant 0 : i32
    return %c0_i32, %c0_i32_0, %c0_i32_1 : i32, i32, i32
  }
  func.func @transform_2(%arg0: i32) -> (i32, i32) {
    %c0_i32 = arith.constant 0 : i32
    %c0_i32_0 = arith.constant 0 : i32
    %c0_i32_1 = arith.constant 0 : i32
    return %c0_i32, %c0_i32_0 : i32, i32
  }
  func.func @transform_3(%arg0: i32) -> (i32, i32, i32) {
    %c0_i32 = arith.constant 0 : i32
    %c0_i32_0 = arith.constant 0 : i32
    %c0_i32_1 = arith.constant 0 : i32
    return %c0_i32, %arg0, %c0_i32_0 : i32, i32, i32
  }
  func.func @transform_4(%arg0: i32) -> (i32, i32, i32) {
    %c0_i32 = arith.constant 0 : i32
    %c0_i32_0 = arith.constant 0 : i32
    %c0_i32_1 = arith.constant 0 : i32
    return %c0_i32, %arg0, %c0_i32_0 : i32, i32, i32
  }
}

</mosaic_0001>

<llo_original>
// kernel: tpu_custom_call.1
$region0: #{tpu_custom_call.1}
  #allocation0 [shape = 'u32[]', space=smem, size = 0x4, offset = 0x4, fixed_abs, tag = 'smem constant byte address 0x4 - core index']
  #allocation1 [shape = 'u32[144,128]{1,0:T(1,128)}', space=vmem, size = 0x12000, scoped, tag = 'internal scratch']
  %s0 = inlined_call_operand.vmem [shape: f32[1,16,8], index: 0, kind: input, shape index: {}]
  %s1 = inlined_call_operand.vmem [shape: f32[1,8,48], index: 1, kind: input, shape index: {}]
  %s2 = inlined_call_operand.vmem [shape: f32[1,48], index: 2, kind: input, shape index: {}]
  %s3 = inlined_call_operand.vmem [shape: f32[3,16,8], index: 3, kind: output, shape index: {0}]
  %s4 = inlined_call_operand.vmem [shape: f32[3,16,8], index: 4, kind: output, shape index: {1}]
  %5 = xla_tuple %s3, %s4
  %s6 = sld [smem:[#allocation0]]
  $region30: #{tpu_custom_call.1} parent=0
    _
  %s8 = ssub.s32 1, %s6
  %s9 = scalar_select 0, %s8, %s6
  // Predicated region
  $region2: #{tpu_custom_call.1} parent=0 // pred_check
    _
  $region3: #{tpu_custom_call.1} parent=0 // pred_check_branch
    %11 = sbr.rel (0) target = $region5
  $region4: #{tpu_custom_call.1} parent=0 // pred_region
    _
  $region5: #{tpu_custom_call.1} parent=0 // pred_fallthru
    _
  // Predicated region
  $region6: #{tpu_custom_call.1} parent=0 // pred_check
    _
  $region7: #{tpu_custom_call.1} parent=0 // pred_check_branch
    %13 = sbr.rel (0) target = $region9
  $region8: #{tpu_custom_call.1} parent=0 // pred_region
    _
  $region9: #{tpu_custom_call.1} parent=0 // pred_fallthru
    _
  // Predicated region
  $region10: #{tpu_custom_call.1} parent=0 // pred_check
    _
  $region11: #{tpu_custom_call.1} parent=0 // pred_check_branch
    %15 = sbr.rel (0) target = $region13
  $region12: #{tpu_custom_call.1} parent=0 // pred_region
    _
  $region13: #{tpu_custom_call.1} parent=0 // pred_fallthru
    _
  %v16 = vld [vmem:[%s0] sm:$0xff]
  %v17 = vld [vmem:[%s0 + $0x8] sm:$0xff]
  %v18 = vld [vmem:[%s1] sm:$0xff]
  %v19 = vld [vmem:[%s2] sm:$0x1]
  %v21 = vlaneseq
  %v22 = vshrl.u32 %v21, 7
  %v23 = vsub.s32 0, %v22
  %v24 = vrot.slane %v19, %v23
  %vm26 = vcmask 64512
  %v28 = vsel %vm26, %v16, 0
  %v31 = vsel %vm26, %v17, 0
  %33 = vmatprep.subr.mxu0 0.0
  %34 = vmatpush1.msra.mxu0 0.0
  %35 = vmatprep.subr.mxu0 0.0
  %36 = vmatpush1.msra.mxu0 0.0
  %37 = vmatprep.subr.mxu0 0.0
  %38 = vmatpush1.msra.mxu0 0.0
  %39 = vmatprep.subr.mxu0 0.0
  %40 = vmatpush1.msra.mxu0 0.0
  %41 = vmatprep.subr.mxu0 0.0
  %42 = vmatpush1.msra.mxu0 0.0
  %43 = vmatprep.subr.mxu0 0.0
  %44 = vmatpush1.msra.mxu0 0.0
  %45 = vmatprep.subr.mxu0 0.0
  %46 = vmatpush1.msra.mxu0 0.0
  %47 = vmatprep.subr.mxu0 0.0
  %48 = vmatpush1.msra.mxu0 0.0
  %49 = vmatprep.subr.mxu0 0.0
  %50 = vmatpush1.msra.mxu0 0.0
  %51 = vmatprep.subr.mxu0 0.0
  %52 = vmatpush1.msra.mxu0 0.0
  %53 = vmatprep.subr.mxu0 0.0
  %54 = vmatpush1.msra.mxu0 0.0
  %55 = vmatprep.subr.mxu0 0.0
  %56 = vmatpush1.msra.mxu0 0.0
  %57 = vmatprep.subr.mxu0 0.0
  %58 = vmatpush1.msra.mxu0 0.0
  %59 = vmatprep.subr.mxu0 0.0
  %60 = vmatpush1.msra.mxu0 0.0
  %61 = vmatprep.subr.mxu0 0.0
  %62 = vmatpush1.msra.mxu0 0.0
  %63 = vmatprep.subr.mxu0 0.0
  %64 = vmatpush1.msra.mxu0 %v18
  %65 = vmatprep.subr.mxu0 0.0
  %66 = vmatpush2.msra.mxu0 0.0
  %67 = vmatprep.subr.mxu0 0.0
  %68 = vmatpush2.msra.mxu0 0.0
  %69 = vmatprep.subr.mxu0 0.0
  %70 = vmatpush2.msra.mxu0 0.0
  %71 = vmatprep.subr.mxu0 0.0
  %72 = vmatpush2.msra.mxu0 0.0
  %73 = vmatprep.subr.mxu0 0.0
  %74 = vmatpush2.msra.mxu0 0.0
  %75 = vmatprep.subr.mxu0 0.0
  %76 = vmatpush2.msra.mxu0 0.0
  %77 = vmatprep.subr.mxu0 0.0
  %78 = vmatpush2.msra.mxu0 0.0
  %79 = vmatprep.subr.mxu0 0.0
  %80 = vmatpush2.msra.mxu0 0.0
  %81 = vmatprep.subr.mxu0 0.0
  %82 = vmatpush2.msra.mxu0 0.0
  %83 = vmatprep.subr.mxu0 0.0
  %84 = vmatpush2.msra.mxu0 0.0
  %85 = vmatprep.subr.mxu0 0.0
  %86 = vmatpush2.msra.mxu0 0.0
  %87 = vmatprep.subr.mxu0 0.0
  %88 = vmatpush2.msra.mxu0 0.0
  %89 = vmatprep.subr.mxu0 0.0
  %90 = vmatpush2.msra.mxu0 0.0
  %91 = vmatprep.subr.mxu0 0.0
  %92 = vmatpush2.msra.mxu0 0.0
  %93 = vmatprep.subr.mxu0 0.0
  %94 = vmatpush2.msra.mxu0 0.0
  %95 = vmatprep.subr.mxu0 0.0
  %96 = vmatpush2.msra.mxu0 0.0
  %97 = vmatprep.mubr.f32.mxu0 0.0
  %98 = vmatmul.mubr.f32.gmra.mxu0 %v28
  %v99 = vpop.f32.mrf.mxu0
  %v100 = vadd.f32 %v24, %v99
  %v101 = vpop.f32.mrf.mxu0
  %102 = vmatprep.mubr.f32.mxu0 0.0
  %103 = vmatmul.mubr.f32.gmra.mxu0 %v31
  %v104 = vpop.f32.mrf.mxu0
  %v105 = vadd.f32 %v24, %v104
  %v106 = vpop.f32.mrf.mxu0
  %107 = vdwg.mxu0
  %108 = vst.msk [vmem:[%s3] sm:$0xff] %vm26, %v100
  %109 = vst.msk [vmem:[%s3 + $0x8] sm:$0xff] %vm26, %v105
  %112 = vrot.lane.b32.xlu0 %v100, 104
  %v113 = vpop.permute.xlu0 %112
  %114 = vrot.lane.b32.xlu0 %v105, 104
  %v115 = vpop.permute.xlu0 %114
  %118 = vst.msk [vmem:[%s4] sm:$0xff] %vm26, %v113
  %119 = vst.msk [vmem:[%s4 + $0x8] sm:$0xff] %vm26, %v115
  %120 = vrot.lane.b32.xlu0 %v100, 120
  %v121 = vpop.permute.xlu0 %120
  %122 = vrot.lane.b32.xlu0 %v105, 120
  %v123 = vpop.permute.xlu0 %122
  %s126 = scalar_lea.vmem %s3, 16
  %127 = vst.msk [vmem:[%s126] sm:$0xff] %vm26, %v121
  %128 = vst.msk [vmem:[%s126 + $0x8] sm:$0xff] %vm26, %v123
  %129 = vrot.lane.b32.xlu0 %v100, 96
  %v130 = vpop.permute.xlu0 %129
  %131 = vrot.lane.b32.xlu0 %v105, 96
  %v132 = vpop.permute.xlu0 %131
  %s135 = scalar_lea.vmem %s4, 16
  %136 = vst.msk [vmem:[%s135] sm:$0xff] %vm26, %v130
  %137 = vst.msk [vmem:[%s135 + $0x8] sm:$0xff] %vm26, %v132
  %138 = vrot.lane.b32.xlu0 %v100, 112
  %v139 = vpop.permute.xlu0 %138
  %140 = vrot.lane.b32.xlu0 %v105, 112
  %v141 = vpop.permute.xlu0 %140
  %s144 = scalar_lea.vmem %s3, 32
  %145 = vst.msk [vmem:[%s144] sm:$0xff] %vm26, %v139
  %146 = vst.msk [vmem:[%s144 + $0x8] sm:$0xff] %vm26, %v141
  %147 = vrot.lane.b32.xlu0 %v100, 88
  %v148 = vpop.permute.xlu0 %147
  %149 = vrot.lane.b32.xlu0 %v105, 88
  %v150 = vpop.permute.xlu0 %149
  %s153 = scalar_lea.vmem %s4, 32
  %154 = vst.msk [vmem:[%s153] sm:$0xff] %vm26, %v148
  %155 = vst.msk [vmem:[%s153 + $0x8] sm:$0xff] %vm26, %v150
  // Predicated region
  $region14: #{tpu_custom_call.1} parent=0 // pred_check
    _
  $region15: #{tpu_custom_call.1} parent=0 // pred_check_branch
    %157 = sbr.rel (0) target = $region17
  $region16: #{tpu_custom_call.1} parent=0 // pred_region
    _
  $region17: #{tpu_custom_call.1} parent=0 // pred_fallthru
    _
  // Predicated region
  $region18: #{tpu_custom_call.1} parent=0 // pred_check
    _
  $region19: #{tpu_custom_call.1} parent=0 // pred_check_branch
    %159 = sbr.rel (0) target = $region21
  $region20: #{tpu_custom_call.1} parent=0 // pred_region
    _
  $region21: #{tpu_custom_call.1} parent=0 // pred_fallthru
    _
  // Predicated region
  $region22: #{tpu_custom_call.1} parent=0 // pred_check
    _
  $region23: #{tpu_custom_call.1} parent=0 // pred_check_branch
    %161 = sbr.rel (0) target = $region25
  $region24: #{tpu_custom_call.1} parent=0 // pred_region
    _
  $region25: #{tpu_custom_call.1} parent=0 // pred_fallthru
    _
  // Predicated region
  $region26: #{tpu_custom_call.1} parent=0 // pred_check
    _
  $region27: #{tpu_custom_call.1} parent=0 // pred_check_branch
    %163 = sbr.rel (0) target = $region29
  $region28: #{tpu_custom_call.1} parent=0 // pred_region
    _
  $region29: #{tpu_custom_call.1} parent=0 // pred_fallthru
    _

</llo_original>
